<compile_context>
chip_gen: v7x
topology: tpu7x:2x2x1
jax: 0.10.0
libtpu: 0.0.40
codegen_flags: <defaults>
</compile_context>

<pallas_src>
import functools

import jax
import jax.numpy as jnp
from jax.experimental import pallas as pl
from jax.experimental.pallas import tpu as pltpu


def _round_up(n, m):
    return (n + m - 1) // m * m


# ----------------------------------------------------------------------------
# Kernel: one MXU pass  y = x @ W + b, sigmoid on gripper cols, clamp on scale
# ----------------------------------------------------------------------------
def action_head_kernel(x_ref, w_ref, b_ref, o_ref, *, d):
    """d = act_dim - 1.  Fused output columns:
         [0, d)        arm loc
         [d, 2d)       arm scale        -> max(., 0.001)
         [2d, 2d+2)    gripper loc/scale -> sigmoid, scale also max(., 0.001)
         [2d+2, P)     zero padding (discarded by the wrapper)
    """
    arm_dim = 2 * d
    x = x_ref[...]                                                  # (tm, H)
    y = jnp.dot(x, w_ref[...], preferred_element_type=jnp.float32)  # (tm, P) f32
    y = y + b_ref[...]

    col = jax.lax.broadcasted_iota(jnp.int32, y.shape, 1)
    is_grip = (col >= arm_dim) & (col < arm_dim + 2)
    y = jnp.where(is_grip, jax.nn.sigmoid(y), y)

    is_scale = ((col >= d) & (col < arm_dim)) | (col == arm_dim + 1)
    y = jnp.where(is_scale, jnp.maximum(y, 0.001), y)

    o_ref[...] = y.astype(o_ref.dtype)


# ----------------------------------------------------------------------------
# Parameter init (mimics torch Linear init; weights stored (in, out))
# ----------------------------------------------------------------------------
def init_action_head_params(key, hidden_size, act_dim):
    hid2 = hidden_size // 2
    dims = [
        ("w1", (hidden_size, hid2)), ("b1", (1, hid2)),
        ("w2", (hid2, hid2)),        ("b2", (1, hid2)),
        ("wa", (hid2, 2 * (act_dim - 1))), ("ba", (1, 2 * (act_dim - 1))),
        ("wg", (hid2, 2)),           ("bg", (1, 2)),
    ]
    fan_ins = {"b1": hidden_size, "b2": hid2, "ba": hid2, "bg": hid2}
    params = {}
    keys = jax.random.split(key, len(dims))
    for (name, shape), k in zip(dims, keys):
        bound = 1.0 / jnp.sqrt(shape[0]) if name.startswith("w") \
            else 1.0 / jnp.sqrt(fan_ins[name])
        params[name] = jax.random.uniform(
            k, shape, dtype=jnp.float32, minval=-bound, maxval=bound)
    return params


# ----------------------------------------------------------------------------
# One-time fusion of mlps[0] -> mlps[1] -> {arm, gripper}  (right-associated)
# ----------------------------------------------------------------------------
def fuse_action_head_params(params, act_dim, compute_dtype=jnp.float32):
    """Compute once per weight update.  Returns (w_fused (H,P), b_fused (1,P)).

    Right-associated so the precompute is O(hid2^2*P + H*hid2*P), never
    O(H*hid2^2):  w2h = w2 @ heads;  w_fused = w1 @ w2h.
    """
    hp = jax.lax.Precision.HIGHEST
    p = params
    d = act_dim - 1
    out_dim = 2 * d + 2
    out_pad = _round_up(out_dim, 8)

    w_heads = jnp.concatenate([p["wa"], p["wg"]], axis=1)            # (hid2, out)
    b_heads = jnp.concatenate([p["ba"], p["bg"]], axis=1)            # (1, out)

    w2h = jnp.dot(p["w2"], w_heads, precision=hp)                    # (hid2, out)
    w_fused = jnp.dot(p["w1"], w2h, precision=hp)                    # (H, out)
    b_fused = (jnp.dot(p["b1"], w2h, precision=hp)
               + jnp.dot(p["b2"], w_heads, precision=hp)
               + b_heads)                                            # (1, out)

    pad = out_pad - out_dim
    w_fused = jnp.pad(w_fused, ((0, 0), (0, pad))).astype(compute_dtype)
    b_fused = jnp.pad(b_fused, ((0, 0), (0, pad))).astype(jnp.float32)
    return w_fused, b_fused


# ----------------------------------------------------------------------------
# Row-tile selection (generation-aware VMEM budgeting)
# ----------------------------------------------------------------------------
def _choose_tm(M, H, out_pad, itemsize):
    bytes_per_row = (H + out_pad) * itemsize
    target_bytes = 2 << 20            # ~2 MiB of x per grid step (amortize ~0.35us)
    vmem_budget = 24 << 20            # double-buffered x+out tiles; fits v7x/v5e

    tm = target_bytes // max(1, H * itemsize)
    tm = max(512, min(tm, 4096))                      # floor 512, cap 4096
    tm = min(tm, max(16, vmem_budget // (2 * bytes_per_row)))
    tm = min(tm, _round_up(M, 16))                    # don't exceed the problem
    tm = max(16, (tm // 16) * 16)                     # multiple of 16 (bf16 packing)

    # v7x megacore: prefer an even number of grid steps when the grid is small.
    grid = pl.cdiv(M, tm)
    if grid % 2 == 1 and grid < 8 and M > 16:
        tm = max(16, _round_up(pl.cdiv(M, grid + 1), 16))
    return tm


# ----------------------------------------------------------------------------
# Forward (fused weights are precomputed & passed in; no per-call re-fusion)
# ----------------------------------------------------------------------------
@functools.partial(jax.jit, static_argnames=("start", "chunk_size", "act_dim"))
def action_head_forward(x, w_fused, b_fused, *, start, chunk_size, act_dim):
    B, T, N, H = x.shape
    d = act_dim - 1
    arm_dim = 2 * d
    out_pad = w_fused.shape[1]

    # TODO(synk): fold this slice into the x BlockSpec via scalar-prefetched
    # `start` once chunk_size alignment to the 8-row sublane tile is
    # guaranteed; for arbitrary chunk_size the (8,128) block constraint
    # forbids it, so accept one slice copy (the reshape below is free).
    embeds = x[:, :, start:start + chunk_size, :]          # (B, T, C, H)
    M = B * T * chunk_size
    xm = embeds.reshape(M, H)                              # native dtype, no pad

    w = w_fused.astype(xm.dtype)                           # no-op when dtypes match
    tm = _choose_tm(M, H, out_pad, xm.dtype.itemsize)
    grid = pl.cdiv(M, tm)

    kernel = functools.partial(action_head_kernel, d=d)

    out = pl.pallas_call(
        kernel,
        out_shape=jax.ShapeDtypeStruct((M, out_pad), jnp.float32),
        grid_spec=pltpu.PrefetchScalarGridSpec(
            num_scalar_prefetch=0,
            grid=(grid,),
            in_specs=[
                pl.BlockSpec((tm, H), lambda i: (i, 0)),         # x rows
                pl.BlockSpec((H, out_pad), lambda i: (0, 0)),    # fused W
                pl.BlockSpec((1, out_pad), lambda i: (0, 0)),    # fused b
            ],
            out_specs=pl.BlockSpec((tm, out_pad), lambda i: (i, 0)),
        ),
        compiler_params=pltpu.CompilerParams(
            dimension_semantics=("parallel",),
            vmem_limit_bytes=48 * 1024 * 1024,
        ),
    )(xm, w, b_fused)

    # Glue: split heads; sigmoid + clamps already applied in-kernel.
    out = out.reshape(B, T, chunk_size, out_pad)
    arm_loc = out[..., 0:d]
    arm_scale = out[..., d:arm_dim]
    grip_loc = out[..., arm_dim:arm_dim + 1]
    grip_scale = out[..., arm_dim + 1:arm_dim + 2]
    return {"arm": {"loc": arm_loc, "scale": arm_scale},
            "gripper": {"loc": grip_loc, "scale": grip_scale}}


# ----------------------------------------------------------------------------
# Pure-JAX reference (sequential layers, full f32 precision)
# ----------------------------------------------------------------------------
def _reference_forward(x, params, starts, chunk_size, act_dim):
    hp = jax.lax.Precision.HIGHEST
    p = params
    B, T, N, H = x.shape
    start = starts["act"]
    e = x[:, :, start:start + chunk_size, :].reshape(-1, H)
    h = jnp.dot(e, p["w1"], precision=hp) + p["b1"][0]
    h = jnp.dot(h, p["w2"], precision=hp) + p["b2"][0]
    arm = jnp.dot(h, p["wa"], precision=hp) + p["ba"][0]
    grip = jax.nn.sigmoid(jnp.dot(h, p["wg"], precision=hp) + p["bg"][0])
    arm = arm.reshape(B, T, chunk_size, 2, act_dim - 1)
    grip = grip.reshape(B, T, chunk_size, 2, 1)
    return {"arm": {"loc": arm[..., 0, :],
                    "scale": jnp.maximum(arm[..., 1, :], 0.001)},
            "gripper": {"loc": grip[..., 0, :],
                        "scale": jnp.maximum(grip[..., 1, :], 0.001)}}


if __name__ == "__main__":
    hidden_size = 32
    act_dim = 7
    chunk_size = 4
    B, T, N = 2, 3, 8
    starts = {"act": 2}
    tokens = {"act": chunk_size}  # unused; mirrors the torch signature

    key = jax.random.PRNGKey(0)
    kx, kp = jax.random.split(key)
    x = jax.random.normal(kx, (B, T, N, hidden_size), dtype=jnp.float32)
    params = init_action_head_params(kp, hidden_size, act_dim)

    # Fuse once (per weight update), not per forward call.
    w_fused, b_fused = fuse_action_head_params(params, act_dim,
                                               compute_dtype=x.dtype)

    out = action_head_forward(x, w_fused, b_fused,
                              start=starts["act"], chunk_size=chunk_size,
                              act_dim=act_dim)
    jax.block_until_ready(out)

    ref = _reference_forward(x, params, starts, chunk_size, act_dim)
    for head in ("arm", "gripper"):
        for field in ("loc", "scale"):
            assert out[head][field].shape == ref[head][field].shape, (head, field)
            assert jnp.allclose(out[head][field], ref[head][field],
                                atol=2e-4, rtol=2e-4), (head, field)

    assert out["arm"]["loc"].shape == (B, T, chunk_size, act_dim - 1)
    assert out["gripper"]["loc"].shape == (B, T, chunk_size, 1)

    print("KERNEL_OK")
</pallas_src>

<mosaic_0001>
module attributes {stable_mosaic.version = 11 : i64} {
  func.func @action_head_kernel(%arg0: i32, %arg1: memref<16x32xf32, #tpu.memory_space<vmem>>, %arg2: memref<32x16xf32, #tpu.memory_space<vmem>>, %arg3: memref<1x16xf32, #tpu.memory_space<vmem>>, %arg4: memref<16x16xf32, #tpu.memory_space<vmem>>) attributes {dimension_semantics = [#tpu.dimension_semantics<parallel>], iteration_bounds = array<i64: 2>, scalar_prefetch = 0 : i64, scratch_operands = 0 : i64, tpu.core_type = #tpu.core_type<tc>, window_params = [{transform_indices = @transform_0, window_bounds = array<i64: 16, 32>}, {pipeline_mode = #tpu.pipeline_mode<synchronous>, transform_indices = @transform_1, window_bounds = array<i64: 32, 16>}, {pipeline_mode = #tpu.pipeline_mode<synchronous>, transform_indices = @transform_2, window_bounds = array<i64: 1, 16>}, {transform_indices = @transform_3, window_bounds = array<i64: 16, 16>}]} {
    %c0 = arith.constant 0 : index
    %c0_0 = arith.constant 0 : index
    %0 = vector.load %arg1[%c0, %c0_0] : memref<16x32xf32, #tpu.memory_space<vmem>>, vector<16x32xf32>
    %c0_1 = arith.constant 0 : index
    %c0_2 = arith.constant 0 : index
    %1 = vector.load %arg2[%c0_1, %c0_2] : memref<32x16xf32, #tpu.memory_space<vmem>>, vector<32x16xf32>
    %cst = arith.constant dense<0.000000e+00> : vector<16x16xf32>
    %2 = tpu.matmul %0, %1, %cst {dimension_numbers = #tpu.dot_dimension_numbers<[1], [0], [0], [1], [0, 0, 1, 1], [], []>} : vector<16x32xf32>, vector<32x16xf32>, vector<16x16xf32> -> vector<16x16xf32>
    %c0_3 = arith.constant 0 : index
    %c0_4 = arith.constant 0 : index
    %3 = vector.load %arg3[%c0_3, %c0_4] : memref<1x16xf32, #tpu.memory_space<vmem>>, vector<1x16xf32>
    %4 = vector.broadcast %3 : vector<1x16xf32> to vector<16x16xf32>
    %5 = arith.addf %2, %4 : vector<16x16xf32>
    %6 = tpu.iota {dimensions = array<i32: 1>} : vector<16x16xi32>
    %c12_i32 = arith.constant 12 : i32
    %7 = vector.broadcast %c12_i32 : i32 to vector<16x16xi32>
    %8 = arith.cmpi sge, %6, %7 : vector<16x16xi32>
    %c14_i32 = arith.constant 14 : i32
    %9 = vector.broadcast %c14_i32 : i32 to vector<16x16xi32>
    %10 = arith.cmpi slt, %6, %9 : vector<16x16xi32>
    %11 = arith.andi %8, %10 : vector<16x16xi1>
    %12 = arith.negf %5 : vector<16x16xf32>
    %13 = math.exp %12 : vector<16x16xf32>
    %cst_5 = arith.constant 1.000000e+00 : f32
    %14 = vector.broadcast %cst_5 : f32 to vector<16x16xf32>
    %15 = arith.addf %14, %13 : vector<16x16xf32>
    %16 = arith.divf %14, %15 : vector<16x16xf32>
    %17 = arith.select %11, %16, %5 : vector<16x16xi1>, vector<16x16xf32>
    %c6_i32 = arith.constant 6 : i32
    %18 = vector.broadcast %c6_i32 : i32 to vector<16x16xi32>
    %19 = arith.cmpi sge, %6, %18 : vector<16x16xi32>
    %c12_i32_6 = arith.constant 12 : i32
    %20 = vector.broadcast %c12_i32_6 : i32 to vector<16x16xi32>
    %21 = arith.cmpi slt, %6, %20 : vector<16x16xi32>
    %22 = arith.andi %19, %21 : vector<16x16xi1>
    %c13_i32 = arith.constant 13 : i32
    %23 = vector.broadcast %c13_i32 : i32 to vector<16x16xi32>
    %24 = arith.cmpi eq, %6, %23 : vector<16x16xi32>
    %25 = arith.ori %22, %24 : vector<16x16xi1>
    %cst_7 = arith.constant 1.000000e-03 : f32
    %26 = vector.broadcast %cst_7 : f32 to vector<16x16xf32>
    %27 = arith.maximumf %17, %26 : vector<16x16xf32>
    %28 = arith.select %25, %27, %17 : vector<16x16xi1>, vector<16x16xf32>
    %c0_8 = arith.constant 0 : index
    %c0_9 = arith.constant 0 : index
    %29 = vector.load %arg4[%c0_8, %c0_9] : memref<16x16xf32, #tpu.memory_space<vmem>>, vector<16x16xf32>
    tpu.vector_store %arg4[%c0_8, %c0_9], %28 {strides = array<i32>} : memref<16x16xf32, #tpu.memory_space<vmem>>, vector<16x16xf32>,
    return
  }
  func.func @transform_0(%arg0: i32) -> (i32, i32) {
    %c0_i32 = arith.constant 0 : i32
    %c0_i32_0 = arith.constant 0 : i32
    return %arg0, %c0_i32 : i32, i32
  }
  func.func @transform_1(%arg0: i32) -> (i32, i32) {
    %c0_i32 = arith.constant 0 : i32
    %c0_i32_0 = arith.constant 0 : i32
    %c0_i32_1 = arith.constant 0 : i32
    return %c0_i32, %c0_i32_0 : i32, i32
  }
  func.func @transform_2(%arg0: i32) -> (i32, i32) {
    %c0_i32 = arith.constant 0 : i32
    %c0_i32_0 = arith.constant 0 : i32
    %c0_i32_1 = arith.constant 0 : i32
    return %c0_i32, %c0_i32_0 : i32, i32
  }
  func.func @transform_3(%arg0: i32) -> (i32, i32) {
    %c0_i32 = arith.constant 0 : i32
    %c0_i32_0 = arith.constant 0 : i32
    return %arg0, %c0_i32 : i32, i32
  }
}

</mosaic_0001>

<llo_original>
// kernel: action_head_forward.1
$region0: #{action_head_forward.1}
  #allocation0 [shape = 'u32[]', space=smem, size = 0x4, offset = 0x4, fixed_abs, tag = 'smem constant byte address 0x4 - core index']
  #allocation1 [shape = 'u32[144,128]{1,0:T(1,128)}', space=vmem, size = 0x12000, scoped, tag = 'internal scratch']
  %s0 = inlined_call_operand.vmem [shape: f32[24,32], index: 0, kind: input, shape index: {}]
  %s1 = inlined_call_operand.vmem [shape: f32[32,16], index: 1, kind: input, shape index: {}]
  %s2 = inlined_call_operand.vmem [shape: f32[1,16], index: 2, kind: input, shape index: {}]
  %s3 = inlined_call_operand.vmem [shape: f32[24,16], index: 3, kind: output, shape index: {}]
  %s4 = sld [smem:[#allocation0]]
  $region93: #{action_head_forward.1} parent=0
    _
  %s6 = ssub.s32 1, %s4
  %s7 = scalar_select 0, %s6, %s4
  $region1: #{action_head_forward.1} parent=0
    #allocation2 [shape = 'u8[16384]{0}', space=vmem, size = 0x4000, scoped, tag = 'output window, operand 0']
    loop: start=0, step=1, limit=4
    $region2: #{action_head_forward.1} parent=1 // loop_pre_header
      _
    $region3: #{action_head_forward.1} parent=1 // loop_header
      %s9 = sphi 0, %s13
      %p10 = scmp.ge.s32.totalorder %s9, 4
      %s19 = sphi 0, %s21
      %s22 = sphi 0, %s19
      %s23 = sphi 0, %s22
      %s39 = sphi 0, %s23
      %s43 = sphi 0, %s43
      %s45 = sphi 0, %s43
      %s46 = sphi 0, %s45
      %s60 = sphi 0, %s46
      %s64 = sphi 0, %s64
      %s66 = sphi 0, %s64
      %s67 = sphi 0, %s66
      %s81 = sphi 0, %s67
      %s87 = sphi 0, %s89
      %s90 = sphi 0, %s87
      %s91 = sphi 0, %s90
      %s107 = sphi 0, %s91
    $region4: #{action_head_forward.1} parent=1 // loop_header_branch
      %12 = sbr.rel (%p10) target = $region8
    $region5: #{action_head_forward.1} parent=1 // loop_body
      %s14 = ssub.s32 %s9, 1
      %s15 = ssub.s32 %s9, 2
      %s16 = sadd.s32 %s9, 1
      %s17 = ssub.s32 %s9, %s16
      %p18 = scmp.eq.s32.totalorder %s17, 0
      %s20 = sadd.s32 %s19, 1
      %s21 = scalar_select %p18, %s19, %s20
      %p24 = pneg %p18
      %p25 = scmp.eq.s32.totalorder %s9, 1
      %p26 = por %p24, %p25
      %p27 = scmp.ne.s32.totalorder %s19, %s22
      %p28 = scmp.eq.s32.totalorder %s9, 0
      %p29 = por %p27, %p28
      %p30 = scmp.ne.s32.totalorder %s19, %s22
      %p31 = scmp.eq.s32.totalorder %s14, 1
      %p32 = por %p30, %p31
      %p33 = scmp.ne.s32.totalorder %s22, %s23
      %p34 = scmp.eq.s32.totalorder %s14, 0
      %p35 = por %p33, %p34
      %p36 = scmp.ne.s32.totalorder %s22, %s23
      %p37 = scmp.eq.s32.totalorder %s15, 1
      %p38 = por %p36, %p37
      %p40 = scmp.ne.s32.totalorder %s23, %s39
      %p41 = scmp.eq.s32.totalorder %s15, 0
      %p42 = por %p40, %p41
      %s44 = sadd.s32 %s43, 1
      %p47 = scmp.eq.s32.totalorder %s9, 1
      %p48 = scmp.ne.s32.totalorder %s43, %s45
      %p49 = scmp.eq.s32.totalorder %s9, 0
      %p50 = por %p48, %p49
      %p51 = scmp.ne.s32.totalorder %s43, %s45
      %p52 = scmp.eq.s32.totalorder %s14, 1
      %p53 = por %p51, %p52
      %p54 = scmp.ne.s32.totalorder %s45, %s46
      %p55 = scmp.eq.s32.totalorder %s14, 0
      %p56 = por %p54, %p55
      %p57 = scmp.ne.s32.totalorder %s45, %s46
      %p58 = scmp.eq.s32.totalorder %s15, 1
      %p59 = por %p57, %p58
      %p61 = scmp.ne.s32.totalorder %s46, %s60
      %p62 = scmp.eq.s32.totalorder %s15, 0
      %p63 = por %p61, %p62
      %s65 = sadd.s32 %s64, 1
      %p68 = scmp.eq.s32.totalorder %s9, 1
      %p69 = scmp.ne.s32.totalorder %s64, %s66
      %p70 = scmp.eq.s32.totalorder %s9, 0
      %p71 = por %p69, %p70
      %p72 = scmp.ne.s32.totalorder %s64, %s66
      %p73 = scmp.eq.s32.totalorder %s14, 1
      %p74 = por %p72, %p73
      %p75 = scmp.ne.s32.totalorder %s66, %s67
      %p76 = scmp.eq.s32.totalorder %s14, 0
      %p77 = por %p75, %p76
      %p78 = scmp.ne.s32.totalorder %s66, %s67
      %p79 = scmp.eq.s32.totalorder %s15, 1
      %p80 = por %p78, %p79
      %p82 = scmp.ne.s32.totalorder %s67, %s81
      %p83 = scmp.eq.s32.totalorder %s15, 0
      %p84 = por %p82, %p83
      %s85 = ssub.s32 %s9, %s16
      %p86 = scmp.eq.s32.totalorder %s85, 0
      %s88 = sadd.s32 %s87, 1
      %s89 = scalar_select %p86, %s87, %s88
      %p92 = pneg %p86
      %p93 = scmp.eq.s32.totalorder %s9, 1
      %p94 = por %p92, %p93
      %p95 = scmp.ne.s32.totalorder %s87, %s90
      %p96 = scmp.eq.s32.totalorder %s9, 0
      %p97 = por %p95, %p96
      %p98 = scmp.ne.s32.totalorder %s87, %s90
      %p99 = scmp.eq.s32.totalorder %s14, 1
      %p100 = por %p98, %p99
      %p101 = scmp.ne.s32.totalorder %s90, %s91
      %p102 = scmp.eq.s32.totalorder %s14, 0
      %p103 = por %p101, %p102
      %p104 = scmp.ne.s32.totalorder %s90, %s91
      %p105 = scmp.eq.s32.totalorder %s15, 1
      %p106 = por %p104, %p105
      %p108 = scmp.ne.s32.totalorder %s91, %s107
      %p109 = scmp.eq.s32.totalorder %s15, 0
      %p110 = por %p108, %p109
      %p111 = scmp.le.s32.totalorder 1, %s9
      %p112 = scmp.lt.s32.totalorder %s9, 3
      %p113 = pnand %p111, %p112
      %p114 = pneg %p113
      // Predicated region
      $region9: #{action_head_forward.1} parent=5 // pred_check
        _
      $region10: #{action_head_forward.1} parent=5 // pred_check_branch
        %116 = sbr.rel (%p113) target = $region12
      $region11: #{action_head_forward.1} parent=5 // pred_region
        %s117 = ssub.s32 %s9, 1
        // Predicated region
        $region13: #{action_head_forward.1} parent=11 // pred_check
          %p118 = pneg %p56
        $region14: #{action_head_forward.1} parent=11 // pred_check_branch
          %120 = sbr.rel (%p118) target = $region16
        $region15: #{action_head_forward.1} parent=11 // pred_region
          _
        $region16: #{action_head_forward.1} parent=11 // pred_fallthru
          _
        // Predicated region
        $region17: #{action_head_forward.1} parent=11 // pred_check
          %p121 = pneg %p77
        $region18: #{action_head_forward.1} parent=11 // pred_check_branch
          %123 = sbr.rel (%p121) target = $region20
        $region19: #{action_head_forward.1} parent=11 // pred_region
          _
        $region20: #{action_head_forward.1} parent=11 // pred_fallthru
          _
      $region12: #{action_head_forward.1} parent=5 // pred_fallthru
        _
      %p124 = scmp.lt.s32.totalorder %s9, 2
      // Predicated region
      $region21: #{action_head_forward.1} parent=5 // pred_check
        %p125 = pneg %p124
      $region22: #{action_head_forward.1} parent=5 // pred_check_branch
        %127 = sbr.rel (%p125) target = $region24
      $region23: #{action_head_forward.1} parent=5 // pred_region
        // Predicated region
        $region25: #{action_head_forward.1} parent=23 // pred_check
          %p128 = pneg %p29
        $region26: #{action_head_forward.1} parent=23 // pred_check_branch
          %130 = sbr.rel (%p128) target = $region28
        $region27: #{action_head_forward.1} parent=23 // pred_region
          %s131 = smul.u32 2, %s9
          %s132 = ssub.s32 3, %s131
          %p133 = scmp.lt.s32.totalorder %s132, 2
          %s134 = scalar_select %p133, %s132, 2
          %s135 = smul.u32 128, %s134
          %p136 = scmp.lt.s32.totalorder %s131, 2
          %s137 = scalar_select %p136, %s131, 2
          %s138 = smul.addr %s137, 8
          %s139 = scalar_lea.vmem %s0, %s138
          %s140 = smul.u32 2, %s9
          %s141 = ssub.s32 3, %s140
          %p142 = scmp.lt.s32.totalorder %s141, 2
          %s143 = scalar_select %p142, %s141, 2
          %s144 = smul.u32 128, %s143
        $region28: #{action_head_forward.1} parent=23 // pred_fallthru
          _
      $region24: #{action_head_forward.1} parent=5 // pred_fallthru
        _
      %p145 = scmp.le.s32.totalorder 1, %s9
      %p146 = scmp.lt.s32.totalorder %s9, 3
      %p147 = pnand %p145, %p146
      %p148 = pneg %p147
      // Predicated region
      $region29: #{action_head_forward.1} parent=5 // pred_check
        _
      $region30: #{action_head_forward.1} parent=5 // pred_check_branch
        %150 = sbr.rel (%p147) target = $region32
      $region31: #{action_head_forward.1} parent=5 // pred_region
        %s151 = ssub.s32 %s9, 1
        %s152 = smul.u32 2, %s14
        %s153 = ssub.s32 3, %s152
        %p154 = scmp.lt.s32.totalorder %s153, 2
        %s155 = scalar_select %p154, %s153, 2
        %s156 = smul.u32 128, %s155
        %p157 = scmp.lt.s32.totalorder %s152, 2
        %s158 = scalar_select %p157, %s152, 2
        %s159 = smul.addr %s158, 8
        %s160 = scalar_lea.vmem %s0, %s159
        %p161 = pneg %p35
        %p162 = pneg %p32
        %p163 = pneg %p56
        %p164 = pneg %p53
        %p165 = pneg %p77
        %p166 = pneg %p74
        %p167 = pneg %p103
        %p168 = pneg %p100
        %s169 = sand.u32 %s90, 1
        %s170 = sand.u32 %s90, 1
        %s171 = smul.addr %s170, 16
        %s172 = scalar_lea.vmem [#allocation2], %s171
        %s173 = smul.u32 2, %s14
        %s174 = ssub.s32 3, %s173
        %p175 = scmp.lt.s32.totalorder %s174, 2
        %s176 = scalar_select %p175, %s174, 2
        %s177 = smul.u32 128, %s176
        %p178 = scmp.lt.s32.totalorder %s173, 2
        %s179 = scalar_select %p178, %s173, 2
        %s180 = smul.addr %s179, 8
        %s181 = scalar_lea.vmem %s0, %s180
        %s182 = smul.u32 2, %s14
        %s183 = ssub.s32 3, %s182
        %p184 = scmp.lt.s32.totalorder %s183, 2
        %s185 = scalar_select %p184, %s183, 2
        %s186 = smul.u32 128, %s185
        %s187 = smul.u32 2, %s14
        %s188 = ssub.s32 3, %s187
        %p189 = scmp.lt.s32.totalorder %s188, 2
        %s190 = scalar_select %p189, %s188, 2
        %s191 = smul.u32 128, %s190
        %v192 = vld [vmem:[%s181] sm:$0xff]
        %v193 = vld [vmem:[%s181 + $0x8] sm:$0xff]
        %v194 = vld [vmem:[%s1] sm:$0xff]
        %v195 = vld [vmem:[%s1 + $0x8] sm:$0xff]
        %v196 = vld [vmem:[%s1 + $0x10] sm:$0xff]
        %v197 = vld [vmem:[%s1 + $0x18] sm:$0xff]
        %v198 = vld [vmem:[%s2] sm:$0x1]
        %v200 = vlaneseq
        %v201 = vshrl.u32 %v200, 7
        %v202 = vsub.s32 0, %v201
        %v203 = vrot.slane %v198, %v202
        %vm205 = vcmask 261120
        %v207 = vsel %vm205, %v192, 0
        %v210 = vsel %vm205, %v193, 0
        %212 = vmatprep.subr.mxu0 0.0
        %213 = vmatpush1.msra.mxu0 %v194
        %214 = vmatprep.subr.mxu0 0.0
        %215 = vmatpush1.msra.mxu0 %v195
        %216 = vmatprep.subr.mxu0 0.0
        %217 = vmatpush1.msra.mxu0 %v196
        %218 = vmatprep.subr.mxu0 0.0
        %219 = vmatpush1.msra.mxu0 %v197
        %220 = vmatprep.subr.mxu0 0.0
        %221 = vmatpush1.msra.mxu0 0.0
        %222 = vmatprep.subr.mxu0 0.0
        %223 = vmatpush1.msra.mxu0 0.0
        %224 = vmatprep.subr.mxu0 0.0
        %225 = vmatpush1.msra.mxu0 0.0
        %226 = vmatprep.subr.mxu0 0.0
        %227 = vmatpush1.msra.mxu0 0.0
        %228 = vmatprep.subr.mxu0 0.0
        %229 = vmatpush1.msra.mxu0 0.0
        %230 = vmatprep.subr.mxu0 0.0
        %231 = vmatpush1.msra.mxu0 0.0
        %232 = vmatprep.subr.mxu0 0.0
        %233 = vmatpush1.msra.mxu0 0.0
        %234 = vmatprep.subr.mxu0 0.0
        %235 = vmatpush1.msra.mxu0 0.0
        %236 = vmatprep.subr.mxu0 0.0
        %237 = vmatpush1.msra.mxu0 0.0
        %238 = vmatprep.subr.mxu0 0.0
        %239 = vmatpush1.msra.mxu0 0.0
        %240 = vmatprep.subr.mxu0 0.0
        %241 = vmatpush1.msra.mxu0 0.0
        %242 = vmatprep.subr.mxu0 0.0
        %243 = vmatpush1.msra.mxu0 0.0
        %244 = vmatprep.subr.mxu0 0.0
        %245 = vmatpush1.msra.mxu0 0.0
        %246 = vmatprep.subr.mxu0 0.0
        %247 = vmatpush1.msra.mxu0 0.0
        %248 = vmatprep.subr.mxu0 0.0
        %249 = vmatpush1.msra.mxu0 0.0
        %250 = vmatprep.subr.mxu0 0.0
        %251 = vmatpush1.msra.mxu0 0.0
        %252 = vmatprep.subr.mxu0 0.0
        %253 = vmatpush1.msra.mxu0 0.0
        %254 = vmatprep.subr.mxu0 0.0
        %255 = vmatpush1.msra.mxu0 0.0
        %256 = vmatprep.subr.mxu0 0.0
        %257 = vmatpush1.msra.mxu0 0.0
        %258 = vmatprep.subr.mxu0 0.0
        %259 = vmatpush1.msra.mxu0 0.0
        %260 = vmatprep.subr.mxu0 0.0
        %261 = vmatpush1.msra.mxu0 0.0
        %262 = vmatprep.subr.mxu0 0.0
        %263 = vmatpush1.msra.mxu0 0.0
        %264 = vmatprep.subr.mxu0 0.0
        %265 = vmatpush1.msra.mxu0 0.0
        %266 = vmatprep.subr.mxu0 0.0
        %267 = vmatpush1.msra.mxu0 0.0
        %268 = vmatprep.subr.mxu0 0.0
        %269 = vmatpush1.msra.mxu0 0.0
        %270 = vmatprep.subr.mxu0 0.0
        %271 = vmatpush1.msra.mxu0 0.0
        %272 = vmatprep.subr.mxu0 0.0
        %273 = vmatpush1.msra.mxu0 0.0
        %274 = vmatprep.subr.mxu0 0.0
        %275 = vmatpush1.msra.mxu0 0.0
        %276 = vmatprep.mubr.f32.mxu0 0.0
        %277 = vmatmul.mubr.f32.gmra.mrb[0].mxu0 %v207
        %v278 = vpop.f32.mrb[0].mxu0
        %v279 = vadd.f32 %v203, %v278
        %v280 = vpop.f32.mrb[0].mxu0
        %281 = vmatprep.mubr.f32.mxu0 0.0
        %282 = vmatmul.mubr.f32.gmra.mrb[0].mxu0 %v210
        %v283 = vpop.f32.mrb[0].mxu0
        %v284 = vadd.f32 %v203, %v283
        %v285 = vpop.f32.mrb[0].mxu0
        %286 = vdwg.mxu0
        %v287 = vlaneseq
        %v288 = vand.u32 %v287, 127
        %vm289 = vcmp.ge.s32.totalorder %v288, 12
        %vm290 = vcmp.lt.s32.totalorder %v288, 14
        %vm291 = vmand %vm289, %vm290
        %v292 = vxor.u32 %v279, 2147483648
        %v293 = vxor.u32 %v284, 2147483648
        %v294 = vmul.f32 %v292, 1.442695
        %v295 = vpow.pop %v294
        %v296 = vmul.f32 %v293, 1.442695
        %v297 = vpow.pop %v296
        %v298 = vadd.f32 %v295, 1.0
        %v299 = vadd.f32 %v297, 1.0
        %v300 = vrcp.pop %v298
        %v301 = vmul.f32 1.0, %v300
        %v302 = vrcp.pop %v299
        %v303 = vmul.f32 1.0, %v302
        %v304 = vsel %vm291, %v301, %v279
        %v305 = vsel %vm291, %v303, %v284
        %vm306 = vcmp.ge.s32.totalorder %v288, 6
        %vm307 = vcmp.lt.s32.totalorder %v288, 12
        %vm308 = vmand %vm306, %vm307
        %vm309 = vcmp.eq.s32.totalorder %v288, 13
        %vm310 = vmor %vm308, %vm309
        %v311 = vmax.f32 %v304, 0.001
        %v312 = vmax.f32 %v305, 0.001
        %v313 = vsel %vm310, %v311, %v304
        %v314 = vsel %vm310, %v312, %v305
        %vm315 = vcmask 130048
        %316 = vst.msk [vmem:[%s172] sm:$0xff] %vm315, %v313
        %317 = vst.msk [vmem:[%s172 + $0x8] sm:$0xff] %vm315, %v314
        %s318 = sand.u32 %s90, 1
        %s319 = sand.u32 %s90, 1
        %s320 = smul.addr %s319, 16
        %s321 = scalar_lea.vmem [#allocation2], %s320
        // Predicated region
        $region33: #{action_head_forward.1} parent=31 // pred_check
          %p322 = pneg %p100
        $region34: #{action_head_forward.1} parent=31 // pred_check_branch
          %324 = sbr.rel (%p322) target = $region36
        $region35: #{action_head_forward.1} parent=31 // pred_region
          %s325 = smul.u32 2, %s14
          %s326 = ssub.s32 3, %s325
          %p327 = scmp.lt.s32.totalorder %s326, 2
          %s328 = scalar_select %p327, %s326, 2
          %s329 = smul.u32 128, %s328
          %p330 = scmp.ne.s32.totalorder 0, %s329
          %s331 = smul.addr %s325, 8
          %s332 = scalar_lea.vmem %s3, %s331
          // Predicated region
          $region37: #{action_head_forward.1} parent=35 // pred_check
            %p333 = pneg %p330
          $region38: #{action_head_forward.1} parent=35 // pred_check_branch
            %335 = sbr.rel (%p333) target = $region40
          $region39: #{action_head_forward.1} parent=35 // pred_region
            // Predicated region
            $region41: #{action_head_forward.1} parent=39 // pred_check
              _
            $region42: #{action_head_forward.1} parent=39 // pred_check_branch
              %337 = sbr.rel (0) target = $region44
            $region43: #{action_head_forward.1} parent=39 // pred_region
              // Predicated region
              $region63: #{action_head_forward.1} parent=43 // pred_check
                _
              $region64: #{action_head_forward.1} parent=43 // pred_check_branch
                %388 = sbr.rel (0) target = $region66
              $region65: #{action_head_forward.1} parent=43 // pred_region
                %s389 = sshrl.u32 %s328, 1
                // While loop
                $region67: #{action_head_forward.1} parent=65 // loop_pre_header
                  _
                $region68: #{action_head_forward.1} parent=65 // loop_header
                  %s391 = sphi 0, %s393
                  %p392 = scmp.ge.s32.totalorder %s391, %s389
                  %s396 = sphi 0, %s405
                  %s397 = sphi %s321, %s408
                  %s398 = sphi %s332, %s409
                $region69: #{action_head_forward.1} parent=65 // loop_header_branch
                  %395 = sbr.rel (%p392) target = $region73
                $region70: #{action_head_forward.1} parent=65 // loop_body
                  %v399 = vld [vmem:[%s397] sm:$0xff]
                  %400 = vst [vmem:[%s398] sm:$0xff] %v399
                  %v401 = vld [vmem:[%s397 + $0x8] sm:$0xff]
                  %402 = vst [vmem:[%s398 + $0x8] sm:$0xff] %v401
                  %s403 = sadd.s32 1, %s396
                  %p404 = scmp.ge.s32.totalorder %s403, %s389
                  %s405 = scalar_select %p404, 0, %s403
                  %s406 = smul.u32 %s405, 16
                  %s407 = smul.u32 %s405, 16
                  %s408 = scalar_lea.vmem %s321, %s406 [#allocation2]
                  %s409 = scalar_lea.vmem %s332, %s407
                $region71: #{action_head_forward.1} parent=65 // loop_footer
                  %s393 = sadd.s32 %s391, 1
                $region72: #{action_head_forward.1} parent=65 // loop_footer_branch
                  %390 = sbr.rel target = $region68
                $region73: #{action_head_forward.1} parent=65 // loop_exit
                  _
                %s410 = sshrl.u32 %s328, 1
                %s411 = sand.u32 %s328, 1
                %s412 = smul.u32 %s410, 2
                %s413 = smul.u32 8, %s412
                %s414 = scalar_lea.vmem %s321, %s413 [#allocation2]
                %s415 = smul.u32 8, %s412
                %s416 = scalar_lea.vmem %s332, %s415
                // While loop
                $region74: #{action_head_forward.1} parent=65 // loop_pre_header
                  _
                $region75: #{action_head_forward.1} parent=65 // loop_header
                  %s418 = sphi 0, %s420
                  %p419 = scmp.ge.s32.totalorder %s418, %s411
                  %s423 = sphi 0, %s430
                  %s424 = sphi %s414, %s433
                  %s425 = sphi %s416, %s434
                $region76: #{action_head_forward.1} parent=65 // loop_header_branch
                  %422 = sbr.rel (%p419) target = $region80
                $region77: #{action_head_forward.1} parent=65 // loop_body
                  %v426 = vld [vmem:[%s424] sm:$0xff]
                  %427 = vst [vmem:[%s425] sm:$0xff] %v426
                  %s428 = sadd.s32 1, %s423
                  %p429 = scmp.ge.s32.totalorder %s428, %s411
                  %s430 = scalar_select %p429, 0, %s428
                  %s431 = smul.u32 %s430, 8
                  %s432 = smul.u32 %s430, 8
                  %s433 = scalar_lea.vmem %s414, %s431 [#allocation2]
                  %s434 = scalar_lea.vmem %s416, %s432
                $region78: #{action_head_forward.1} parent=65 // loop_footer
                  %s420 = sadd.s32 %s418, 1
                $region79: #{action_head_forward.1} parent=65 // loop_footer_branch
                  %417 = sbr.rel target = $region75
                $region80: #{action_head_forward.1} parent=65 // loop_exit
                  _
              $region66: #{action_head_forward.1} parent=43 // pred_fallthru
                _
              // Predicated region
              $region81: #{action_head_forward.1} parent=43 // pred_check
                _
              $region82: #{action_head_forward.1} parent=43 // pred_check_branch
                %436 = sbr.rel target = $region84
              $region83: #{action_head_forward.1} parent=43 // pred_region
                _
              $region84: #{action_head_forward.1} parent=43 // pred_fallthru
                _
            $region44: #{action_head_forward.1} parent=39 // pred_fallthru
              _
            // Predicated region
            $region45: #{action_head_forward.1} parent=39 // pred_check
              _
            $region46: #{action_head_forward.1} parent=39 // pred_check_branch
              %339 = sbr.rel target = $region48
            $region47: #{action_head_forward.1} parent=39 // pred_region
              %s341 = sshrl.u32 %s328, 1
              // While loop
              $region49: #{action_head_forward.1} parent=47 // loop_pre_header
                _
              $region50: #{action_head_forward.1} parent=47 // loop_header
                %s343 = sphi 0, %s345
                %p344 = scmp.ge.s32.totalorder %s343, %s341
                %s348 = sphi 0, %s357
                %s349 = sphi %s321, %s360
                %s350 = sphi %s332, %s361
              $region51: #{action_head_forward.1} parent=47 // loop_header_branch
                %347 = sbr.rel (%p344) target = $region55
              $region52: #{action_head_forward.1} parent=47 // loop_body
                %v351 = vld [vmem:[%s349] sm:$0xff]
                %352 = vst [vmem:[%s350] sm:$0xff] %v351
                %v353 = vld [vmem:[%s349 + $0x8] sm:$0xff]
                %354 = vst [vmem:[%s350 + $0x8] sm:$0xff] %v353
                %s355 = sadd.s32 1, %s348
                %p356 = scmp.ge.s32.totalorder %s355, %s341
                %s357 = scalar_select %p356, 0, %s355
                %s358 = smul.u32 %s357, 16
                %s359 = smul.u32 %s357, 16
                %s360 = scalar_lea.vmem %s321, %s358 [#allocation2]
                %s361 = scalar_lea.vmem %s332, %s359
              $region53: #{action_head_forward.1} parent=47 // loop_footer
                %s345 = sadd.s32 %s343, 1
              $region54: #{action_head_forward.1} parent=47 // loop_footer_branch
                %342 = sbr.rel target = $region50
              $region55: #{action_head_forward.1} parent=47 // loop_exit
                _
              %s362 = sshrl.u32 %s328, 1
              %s363 = sand.u32 %s328, 1
              %s364 = smul.u32 %s362, 2
              %s365 = smul.u32 8, %s364
              %s366 = scalar_lea.vmem %s321, %s365 [#allocation2]
              %s367 = smul.u32 8, %s364
              %s368 = scalar_lea.vmem %s332, %s367
              // While loop
              $region56: #{action_head_forward.1} parent=47 // loop_pre_header
                _
              $region57: #{action_head_forward.1} parent=47 // loop_header
                %s370 = sphi 0, %s372
                %p371 = scmp.ge.s32.totalorder %s370, %s363
                %s375 = sphi 0, %s382
                %s376 = sphi %s366, %s385
                %s377 = sphi %s368, %s386
              $region58: #{action_head_forward.1} parent=47 // loop_header_branch
                %374 = sbr.rel (%p371) target = $region62
              $region59: #{action_head_forward.1} parent=47 // loop_body
                %v378 = vld [vmem:[%s376] sm:$0xff]
                %379 = vst [vmem:[%s377] sm:$0xff] %v378
                %s380 = sadd.s32 1, %s375
                %p381 = scmp.ge.s32.totalorder %s380, %s363
                %s382 = scalar_select %p381, 0, %s380
                %s383 = smul.u32 %s382, 8
                %s384 = smul.u32 %s382, 8
                %s385 = scalar_lea.vmem %s366, %s383 [#allocation2]
                %s386 = scalar_lea.vmem %s368, %s384
              $region60: #{action_head_forward.1} parent=47 // loop_footer
                %s372 = sadd.s32 %s370, 1
              $region61: #{action_head_forward.1} parent=47 // loop_footer_branch
                %369 = sbr.rel target = $region57
              $region62: #{action_head_forward.1} parent=47 // loop_exit
                _
            $region48: #{action_head_forward.1} parent=39 // pred_fallthru
              _
          $region40: #{action_head_forward.1} parent=35 // pred_fallthru
            _
          %437 = vnop
        $region36: #{action_head_forward.1} parent=31 // pred_fallthru
          _
      $region32: #{action_head_forward.1} parent=5 // pred_fallthru
        _
      %p438 = scmp.le.s32.totalorder 2, %s9
      // Predicated region
      $region85: #{action_head_forward.1} parent=5 // pred_check
        %p439 = pneg %p438
      $region86: #{action_head_forward.1} parent=5 // pred_check_branch
        %441 = sbr.rel (%p439) target = $region88
      $region87: #{action_head_forward.1} parent=5 // pred_region
        %s442 = ssub.s32 %s9, 2
        // Predicated region
        $region89: #{action_head_forward.1} parent=87 // pred_check
          %p443 = pneg %p106
        $region90: #{action_head_forward.1} parent=87 // pred_check_branch
          %445 = sbr.rel (%p443) target = $region92
        $region91: #{action_head_forward.1} parent=87 // pred_region
          %s446 = sand.u32 %s91, 1
          %s447 = sand.u32 %s91, 1
          %s448 = smul.addr %s447, 16
          %s449 = scalar_lea.vmem [#allocation2], %s448
        $region92: #{action_head_forward.1} parent=87 // pred_fallthru
          _
      $region88: #{action_head_forward.1} parent=5 // pred_fallthru
        _
    $region6: #{action_head_forward.1} parent=1 // loop_footer
      %s13 = sadd.s32 1, %s9
    $region7: #{action_head_forward.1} parent=1 // loop_footer_branch
      %8 = sbr.rel target = $region3
    $region8: #{action_head_forward.1} parent=1 // loop_exit
      _

</llo_original>
